<compile_context>
chip_gen: v7x
topology: tpu7x:2x2x1
jax: 0.10.0
libtpu: 0.0.40
codegen_flags: <defaults>
</compile_context>

<pallas_src>
import functools

import jax
import jax.numpy as jnp
from jax.experimental import pallas as pl
from jax.experimental.pallas import tpu as pltpu


def _round_up(x, m):
    return (x + m - 1) // m * m


def _nt_xent_kernel(reps_all_ref, reps_row_ref, out_ref, *,
                    n_valid, batch_size, inv_temp, row_tile, eps):
    c = pl.program_id(0)

    x_all = reps_all_ref[...].astype(jnp.float32)   # (N_pad, D_pad)
    x_row = reps_row_ref[...].astype(jnp.float32)   # (TR,    D_pad)

    eps2 = eps * eps

    # F.normalize(x, dim=1) == x * rsqrt(max(||x||^2, eps^2)).
    # Padded (all-zero) rows stay exactly zero.
    inv_all = jax.lax.rsqrt(
        jnp.maximum(jnp.sum(x_all * x_all, axis=-1, keepdims=True), eps2))
    z_all = x_all * inv_all                                      # (N_pad, D_pad)

    inv_row = jax.lax.rsqrt(
        jnp.maximum(jnp.sum(x_row * x_row, axis=-1, keepdims=True), eps2))
    # Fold 1/T into the row-tile normalization: the matmul below then yields
    # sim / T directly (no extra (TR, N_pad) elementwise scale needed).
    z_row = x_row * (inv_row * inv_temp)                         # (TR, D_pad)

    # logits[i, j] = <z_row_i, z_all_j> = sim(i, j) / T
    # A @ B^T on the MXU, contracting the feature dim directly.
    logits = jax.lax.dot_general(
        z_row, z_all, (((1,), (1,)), ((), ())),
        preferred_element_type=jnp.float32)                      # (TR, N_pad)

    tr, n_pad = logits.shape
    row_g = c * row_tile + jax.lax.broadcasted_iota(jnp.int32, (tr, 1), 0)
    col = jax.lax.broadcasted_iota(jnp.int32, (tr, n_pad), 1)

    valid_row = row_g < n_valid                                  # (TR, 1)
    denom_mask = (col != row_g) & (col < n_valid)                # drop diag + pad cols
    pos_col = jnp.where(row_g < batch_size,
                        row_g + batch_size, row_g - batch_size)  # (TR, 1)
    pos_mask = col == pos_col                                    # (TR, N_pad)

    # Cosine similarities are bounded in [-1, 1] -> exp(sim/T) cannot
    # overflow; matches the reference (no max-subtraction) exactly.
    exp_l = jnp.exp(logits)
    denom_sum = jnp.sum(jnp.where(denom_mask, exp_l, 0.0),
                        axis=-1, keepdims=True)                  # (TR, 1)
    positives = jnp.sum(jnp.where(pos_mask, logits, 0.0),
                        axis=-1, keepdims=True)                  # (TR, 1)

    # -log(exp(pos/T) / denom) = log(denom) - pos/T
    loss_rows = jnp.log(denom_sum) - positives                   # (TR, 1)
    masked = jnp.where(valid_row, loss_rows, 0.0)
    partial = jnp.sum(masked, axis=0, keepdims=True)             # (1, 1)
    out_ref[...] = partial.reshape(1, 1, 1)


def contrastive_loss(emb_i, emb_j, temperature=0.5):
    """NT-Xent loss matching ContrastiveLoss.forward(emb_i, emb_j)."""
    B, D = emb_i.shape
    assert emb_j.shape == (B, D)
    N = 2 * B

    row_tile = min(256, _round_up(N, 8))
    num_chunks = _round_up(N, row_tile) // row_tile
    n_pad = num_chunks * row_tile
    d_pad = _round_up(D, 128)

    reps = jnp.concatenate([emb_i, emb_j], axis=0)
    reps = jnp.pad(reps, ((0, n_pad - N), (0, d_pad - D)))

    kernel = functools.partial(
        _nt_xent_kernel,
        n_valid=N, batch_size=B, inv_temp=float(1.0 / temperature),
        row_tile=row_tile, eps=1e-12)

    grid_spec = pltpu.PrefetchScalarGridSpec(
        num_scalar_prefetch=0,
        grid=(num_chunks,),
        in_specs=[
            pl.BlockSpec((n_pad, d_pad), lambda c: (0, 0)),      # all reps (columns)
            pl.BlockSpec((row_tile, d_pad), lambda c: (c, 0)),   # row tile
        ],
        out_specs=pl.BlockSpec((1, 1, 1), lambda c: (c, 0, 0)),  # per-chunk partial
    )

    # Rough VMEM demand (f32): resident column block + double-buffered row
    # blocks + logits/exp/mask temporaries.  Clamp well under v7x's 64 MiB.
    vmem_bytes = 4 * (2 * n_pad * d_pad + 4 * row_tile * d_pad
                      + 8 * row_tile * n_pad)
    vmem_limit = int(min(max(2 * vmem_bytes, 8 * 2 ** 20), 48 * 2 ** 20))

    partials = pl.pallas_call(
        kernel,
        out_shape=jax.ShapeDtypeStruct((num_chunks, 1, 1), jnp.float32),
        grid_spec=grid_spec,
        compiler_params=pltpu.CompilerParams(
            dimension_semantics=("parallel",),
            vmem_limit_bytes=vmem_limit),
    )(reps, reps)

    return jnp.sum(partials) / jnp.float32(N)


def _reference_loss(emb_i, emb_j, temperature=0.5):
    # Pure-JAX mirror of the PyTorch module (for in-script validation).
    eps = 1e-12
    z_i = emb_i / jnp.maximum(jnp.linalg.norm(emb_i, axis=1, keepdims=True), eps)
    z_j = emb_j / jnp.maximum(jnp.linalg.norm(emb_j, axis=1, keepdims=True), eps)
    reps = jnp.concatenate([z_i, z_j], axis=0)
    sim = jnp.dot(reps, reps.T, precision=jax.lax.Precision.HIGHEST)
    B = emb_i.shape[0]
    N = 2 * B
    pos = jnp.concatenate([jnp.diagonal(sim, B), jnp.diagonal(sim, -B)])
    nominator = jnp.exp(pos / temperature)
    mask = 1.0 - jnp.eye(N, dtype=sim.dtype)
    denominator = jnp.sum(mask * jnp.exp(sim / temperature), axis=1)
    return jnp.sum(-jnp.log(nominator / denominator)) / N


if __name__ == "__main__":
    B, D = 2, 32          # batch_size=2 (so the sim matrix is 4x4), hidden=32
    key = jax.random.PRNGKey(0)
    ki, kj = jax.random.split(key)
    emb_i = jax.random.normal(ki, (B, D), dtype=jnp.float32)
    emb_j = jax.random.normal(kj, (B, D), dtype=jnp.float32)

    loss = contrastive_loss(emb_i, emb_j, temperature=0.5)
    jax.block_until_ready(loss)

    ref = _reference_loss(emb_i, emb_j, temperature=0.5)
    assert loss.shape == ()
    assert bool(jnp.isfinite(loss))
    assert jnp.allclose(loss, ref, rtol=2e-3, atol=2e-3), (loss, ref)
    print("KERNEL_OK")
</pallas_src>

<mosaic_0001>
module attributes {stable_mosaic.version = 11 : i64} {
  func.func @_nt_xent_kernel(%arg0: i32, %arg1: memref<8x128xf32, #tpu.memory_space<vmem>>, %arg2: memref<8x128xf32, #tpu.memory_space<vmem>>, %arg3: memref<1x1x1xf32, #tpu.memory_space<vmem>>) attributes {dimension_semantics = [#tpu.dimension_semantics<parallel>], iteration_bounds = array<i64: 1>, scalar_prefetch = 0 : i64, scratch_operands = 0 : i64, tpu.core_type = #tpu.core_type<tc>, window_params = [{pipeline_mode = #tpu.pipeline_mode<synchronous>, transform_indices = @transform_0, window_bounds = array<i64: 8, 128>}, {transform_indices = @transform_1, window_bounds = array<i64: 8, 128>}, {transform_indices = @transform_2, window_bounds = array<i64: 1, 1, 1>}]} {
    %c0 = arith.constant 0 : index
    %c0_0 = arith.constant 0 : index
    %0 = vector.load %arg1[%c0, %c0_0] : memref<8x128xf32, #tpu.memory_space<vmem>>, vector<8x128xf32>
    %c0_1 = arith.constant 0 : index
    %c0_2 = arith.constant 0 : index
    %1 = vector.load %arg2[%c0_1, %c0_2] : memref<8x128xf32, #tpu.memory_space<vmem>>, vector<8x128xf32>
    %2 = arith.mulf %0, %0 : vector<8x128xf32>
    %cst = arith.constant dense<0.000000e+00> : vector<8xf32>
    %3 = vector.multi_reduction <add>, %2, %cst [1] : vector<8x128xf32> to vector<8xf32>
    %4 = vector.shape_cast %3 : vector<8xf32> to vector<8x1xf32>
    %cst_3 = arith.constant 1.000000e-24 : f32
    %5 = vector.broadcast %cst_3 : f32 to vector<8x1xf32>
    %6 = arith.maximumf %4, %5 : vector<8x1xf32>
    %7 = math.rsqrt %6 : vector<8x1xf32>
    %8 = vector.broadcast %7 : vector<8x1xf32> to vector<8x128xf32>
    %9 = arith.mulf %0, %8 : vector<8x128xf32>
    %10 = arith.mulf %1, %1 : vector<8x128xf32>
    %cst_4 = arith.constant dense<0.000000e+00> : vector<8xf32>
    %11 = vector.multi_reduction <add>, %10, %cst_4 [1] : vector<8x128xf32> to vector<8xf32>
    %12 = vector.shape_cast %11 : vector<8xf32> to vector<8x1xf32>
    %cst_5 = arith.constant 1.000000e-24 : f32
    %13 = vector.broadcast %cst_5 : f32 to vector<8x1xf32>
    %14 = arith.maximumf %12, %13 : vector<8x1xf32>
    %15 = math.rsqrt %14 : vector<8x1xf32>
    %cst_6 = arith.constant 2.000000e+00 : f32
    %16 = vector.broadcast %cst_6 : f32 to vector<8x1xf32>
    %17 = arith.mulf %15, %16 : vector<8x1xf32>
    %18 = vector.broadcast %17 : vector<8x1xf32> to vector<8x128xf32>
    %19 = arith.mulf %1, %18 : vector<8x128xf32>
    %cst_7 = arith.constant dense<0.000000e+00> : vector<8x8xf32>
    %20 = tpu.matmul %19, %9, %cst_7 {dimension_numbers = #tpu.dot_dimension_numbers<[1], [1], [0], [0], [0, 0, 1, 0], [], []>} : vector<8x128xf32>, vector<8x128xf32>, vector<8x8xf32> -> vector<8x8xf32>
    %c8_i32 = arith.constant 8 : i32
    %21 = arith.muli %arg0, %c8_i32 : i32
    %22 = tpu.iota {dimensions = array<i32: 0>} : vector<8x1xi32>
    %23 = vector.broadcast %21 : i32 to vector<8x1xi32>
    %24 = arith.addi %23, %22 : vector<8x1xi32>
    %25 = tpu.iota {dimensions = array<i32: 1>} : vector<8x8xi32>
    %c4_i32 = arith.constant 4 : i32
    %26 = vector.broadcast %c4_i32 : i32 to vector<8x1xi32>
    %27 = arith.cmpi slt, %24, %26 : vector<8x1xi32>
    %28 = vector.broadcast %24 : vector<8x1xi32> to vector<8x8xi32>
    %29 = arith.cmpi ne, %25, %28 : vector<8x8xi32>
    %c4_i32_8 = arith.constant 4 : i32
    %30 = vector.broadcast %c4_i32_8 : i32 to vector<8x8xi32>
    %31 = arith.cmpi slt, %25, %30 : vector<8x8xi32>
    %32 = arith.andi %29, %31 : vector<8x8xi1>
    %c2_i32 = arith.constant 2 : i32
    %33 = vector.broadcast %c2_i32 : i32 to vector<8x1xi32>
    %34 = arith.cmpi slt, %24, %33 : vector<8x1xi32>
    %c2_i32_9 = arith.constant 2 : i32
    %35 = vector.broadcast %c2_i32_9 : i32 to vector<8x1xi32>
    %36 = arith.addi %24, %35 : vector<8x1xi32>
    %c2_i32_10 = arith.constant 2 : i32
    %37 = vector.broadcast %c2_i32_10 : i32 to vector<8x1xi32>
    %38 = arith.subi %24, %37 : vector<8x1xi32>
    %39 = arith.select %34, %36, %38 : vector<8x1xi1>, vector<8x1xi32>
    %40 = vector.broadcast %39 : vector<8x1xi32> to vector<8x8xi32>
    %41 = arith.cmpi eq, %25, %40 : vector<8x8xi32>
    %42 = math.exp %20 : vector<8x8xf32>
    %cst_11 = arith.constant 0.000000e+00 : f32
    %43 = vector.broadcast %cst_11 : f32 to vector<8x8xf32>
    %44 = arith.select %32, %42, %43 : vector<8x8xi1>, vector<8x8xf32>
    %cst_12 = arith.constant dense<0.000000e+00> : vector<8xf32>
    %45 = vector.multi_reduction <add>, %44, %cst_12 [1] : vector<8x8xf32> to vector<8xf32>
    %46 = vector.shape_cast %45 : vector<8xf32> to vector<8x1xf32>
    %cst_13 = arith.constant 0.000000e+00 : f32
    %47 = vector.broadcast %cst_13 : f32 to vector<8x8xf32>
    %48 = arith.select %41, %20, %47 : vector<8x8xi1>, vector<8x8xf32>
    %cst_14 = arith.constant dense<0.000000e+00> : vector<8xf32>
    %49 = vector.multi_reduction <add>, %48, %cst_14 [1] : vector<8x8xf32> to vector<8xf32>
    %50 = vector.shape_cast %49 : vector<8xf32> to vector<8x1xf32>
    %51 = math.log %46 : vector<8x1xf32>
    %52 = arith.subf %51, %50 : vector<8x1xf32>
    %cst_15 = arith.constant 0.000000e+00 : f32
    %53 = vector.broadcast %cst_15 : f32 to vector<8x1xf32>
    %54 = arith.select %27, %52, %53 : vector<8x1xi1>, vector<8x1xf32>
    %cst_16 = arith.constant dense<0.000000e+00> : vector<1xf32>
    %55 = vector.multi_reduction <add>, %54, %cst_16 [0] : vector<8x1xf32> to vector<1xf32>
    %56 = vector.shape_cast %55 : vector<1xf32> to vector<1x1xf32>
    %57 = vector.shape_cast %56 : vector<1x1xf32> to vector<1x1x1xf32>
    %c0_17 = arith.constant 0 : index
    %c0_18 = arith.constant 0 : index
    %c0_19 = arith.constant 0 : index
    %58 = vector.load %arg3[%c0_17, %c0_18, %c0_19] : memref<1x1x1xf32, #tpu.memory_space<vmem>>, vector<1x1x1xf32>
    tpu.vector_store %arg3[%c0_17, %c0_18, %c0_19], %57 {strides = array<i32>} : memref<1x1x1xf32, #tpu.memory_space<vmem>>, vector<1x1x1xf32>,
    return
  }
  func.func @transform_0(%arg0: i32) -> (i32, i32) {
    %c0_i32 = arith.constant 0 : i32
    %c0_i32_0 = arith.constant 0 : i32
    %c0_i32_1 = arith.constant 0 : i32
    return %c0_i32, %c0_i32_0 : i32, i32
  }
  func.func @transform_1(%arg0: i32) -> (i32, i32) {
    %c0_i32 = arith.constant 0 : i32
    %c0_i32_0 = arith.constant 0 : i32
    return %arg0, %c0_i32 : i32, i32
  }
  func.func @transform_2(%arg0: i32) -> (i32, i32, i32) {
    %c0_i32 = arith.constant 0 : i32
    %c0_i32_0 = arith.constant 0 : i32
    %c0_i32_1 = arith.constant 0 : i32
    return %arg0, %c0_i32, %c0_i32_0 : i32, i32, i32
  }
}

</mosaic_0001>

<llo_original>
// kernel: tpu_custom_call.1
$region0: #{tpu_custom_call.1}
  #allocation0 [shape = 'u32[]', space=smem, size = 0x4, offset = 0x4, fixed_abs, tag = 'smem constant byte address 0x4 - core index']
  #allocation1 [shape = 'u32[144,128]{1,0:T(1,128)}', space=vmem, size = 0x12000, scoped, tag = 'internal scratch']
  %s0 = inlined_call_operand.hbm [shape: f32[8,128], index: 0, kind: input, shape index: {}]
  %s1 = inlined_call_operand.hbm [shape: f32[8,128], index: 1, kind: input, shape index: {}]
  %s2 = inlined_call_operand.hbm [shape: f32[1,1,1], index: 2, kind: output, shape index: {}]
  %s3 = sld [smem:[#allocation0]]
  $region26: #{tpu_custom_call.1} parent=0
    _
  %s5 = ssub.s32 1, %s3
  %s6 = scalar_select 0, %s5, %s3
  $region1: #{tpu_custom_call.1} parent=0
    #allocation2 [shape = 'u8[4096]{0}', space=vmem, size = 0x1000, scoped, tag = 'input window, operand 0, single buffered']
    #allocation3 [shape = 's32[1]{0}', space=sflag, size = 0x4, scoped, tag = 'scoped memory for tpu_custom_call.1']
    #allocation4 [shape = 's32[1]{0}', space=sflag, size = 0x4, scoped, tag = 'scoped memory for tpu_custom_call.1']
    #allocation5 [shape = 'u8[4096]{0}', space=vmem, size = 0x1000, scoped, tag = 'input window, operand 1, single buffered']
    #allocation6 [shape = 's32[1]{0}', space=sflag, size = 0x4, scoped, tag = 'scoped memory for tpu_custom_call.1']
    #allocation7 [shape = 'u8[512]{0}', space=vmem, size = 0x400, scoped, tag = 'output window, operand 0, single buffered']
    %7 = vsyncpa [#allocation3], 0
    %8 = vsyncpa [#allocation6], 0
    %9 = vsyncpa [#allocation4], 0
    // Predicated region
    $region2: #{tpu_custom_call.1} parent=1 // pred_check
      _
    $region3: #{tpu_custom_call.1} parent=1 // pred_check_branch
      %11 = sbr.rel (0) target = $region5
    $region4: #{tpu_custom_call.1} parent=1 // pred_region
      %s13 = ssub.s32 128, 128
      %14 = vsyncadd [#allocation3], %s13
      %s16 = sshll.u32 [#allocation2], 4
      %s17 = int_to_ptr.vmem [resolvable:$true] %s16
      %19 = dma.hbm_to_vmem [thread:$0]  %s0, 128, %s17, [#allocation3]
    $region5: #{tpu_custom_call.1} parent=1 // pred_fallthru
      _
    // Predicated region
    $region6: #{tpu_custom_call.1} parent=1 // pred_check
      _
    $region7: #{tpu_custom_call.1} parent=1 // pred_check_branch
      %21 = sbr.rel (0) target = $region9
    $region8: #{tpu_custom_call.1} parent=1 // pred_region
      %s23 = ssub.s32 128, 128
      %24 = vsyncadd [#allocation6], %s23
      %s26 = sshll.u32 [#allocation5], 4
      %s27 = int_to_ptr.vmem [resolvable:$true] %s26
      %29 = dma.hbm_to_vmem [thread:$0]  %s1, 128, %s27, [#allocation6]
    $region9: #{tpu_custom_call.1} parent=1 // pred_fallthru
      _
    // Predicated region
    $region10: #{tpu_custom_call.1} parent=1 // pred_check
      _
    $region11: #{tpu_custom_call.1} parent=1 // pred_check_branch
      %31 = sbr.rel (0) target = $region13
    $region12: #{tpu_custom_call.1} parent=1 // pred_region
      %32 = dma.done [#allocation3], 128
    $region13: #{tpu_custom_call.1} parent=1 // pred_fallthru
      _
    // Predicated region
    $region14: #{tpu_custom_call.1} parent=1 // pred_check
      _
    $region15: #{tpu_custom_call.1} parent=1 // pred_check_branch
      %34 = sbr.rel (0) target = $region17
    $region16: #{tpu_custom_call.1} parent=1 // pred_region
      %35 = dma.done [#allocation6], 128
    $region17: #{tpu_custom_call.1} parent=1 // pred_fallthru
      _
    %v36 = vld [vmem:[#allocation2] sm:$0xff]
    %v37 = vld [vmem:[#allocation5] sm:$0xff]
    %v38 = vmul.f32 %v36, %v36
    %39 = vadd.xlane.f32.xlu0 %v38
    %v40 = vpop.xlane.xlu0 %39
    %v41 = vmax.f32 %v40, 1e-24
    %v42 = vrsqrt.pop %v41
    %v43 = vmul.f32 %v36, %v42
    %v44 = vmul.f32 %v37, %v37
    %45 = vadd.xlane.f32.xlu0 %v44
    %v46 = vpop.xlane.xlu0 %45
    %v47 = vmax.f32 %v46, 1e-24
    %v48 = vrsqrt.pop %v47
    %v49 = vmul.f32 %v48, 2.0
    %v50 = vmul.f32 %v37, %v49
    %51 = vmatprep.subr.mxu0 0.0
    %52 = vmatpush1.xpose.msra.mxu0 %v43
    %53 = vmatprep.subr.mxu0 0.0
    %54 = vmatpush1.xpose.msra.mxu0 0.0
    %55 = vmatprep.subr.mxu0 0.0
    %56 = vmatpush1.xpose.msra.mxu0 0.0
    %57 = vmatprep.subr.mxu0 0.0
    %58 = vmatpush1.xpose.msra.mxu0 0.0
    %59 = vmatprep.subr.mxu0 0.0
    %60 = vmatpush1.xpose.msra.mxu0 0.0
    %61 = vmatprep.subr.mxu0 0.0
    %62 = vmatpush1.xpose.msra.mxu0 0.0
    %63 = vmatprep.subr.mxu0 0.0
    %64 = vmatpush1.xpose.msra.mxu0 0.0
    %65 = vmatprep.subr.mxu0 0.0
    %66 = vmatpush1.xpose.msra.mxu0 0.0
    %67 = vmatprep.subr.mxu0 0.0
    %68 = vmatpush1.xpose.msra.mxu0 0.0
    %69 = vmatprep.subr.mxu0 0.0
    %70 = vmatpush1.xpose.msra.mxu0 0.0
    %71 = vmatprep.subr.mxu0 0.0
    %72 = vmatpush1.xpose.msra.mxu0 0.0
    %73 = vmatprep.subr.mxu0 0.0
    %74 = vmatpush1.xpose.msra.mxu0 0.0
    %75 = vmatprep.subr.mxu0 0.0
    %76 = vmatpush1.xpose.msra.mxu0 0.0
    %77 = vmatprep.subr.mxu0 0.0
    %78 = vmatpush1.xpose.msra.mxu0 0.0
    %79 = vmatprep.subr.mxu0 0.0
    %80 = vmatpush1.xpose.msra.mxu0 0.0
    %81 = vmatprep.subr.mxu0 0.0
    %82 = vmatpush1.xpose.msra.mxu0 0.0
    %83 = vmatprep.subr.mxu0 0.0
    %84 = vmatpush1.xpose.msra.mxu0 0.0
    %85 = vmatprep.subr.mxu0 0.0
    %86 = vmatpush1.xpose.msra.mxu0 0.0
    %87 = vmatprep.subr.mxu0 0.0
    %88 = vmatpush1.xpose.msra.mxu0 0.0
    %89 = vmatprep.subr.mxu0 0.0
    %90 = vmatpush1.xpose.msra.mxu0 0.0
    %91 = vmatprep.subr.mxu0 0.0
    %92 = vmatpush1.xpose.msra.mxu0 0.0
    %93 = vmatprep.subr.mxu0 0.0
    %94 = vmatpush1.xpose.msra.mxu0 0.0
    %95 = vmatprep.subr.mxu0 0.0
    %96 = vmatpush1.xpose.msra.mxu0 0.0
    %97 = vmatprep.subr.mxu0 0.0
    %98 = vmatpush1.xpose.msra.mxu0 0.0
    %99 = vmatprep.subr.mxu0 0.0
    %100 = vmatpush1.xpose.msra.mxu0 0.0
    %101 = vmatprep.subr.mxu0 0.0
    %102 = vmatpush1.xpose.msra.mxu0 0.0
    %103 = vmatprep.subr.mxu0 0.0
    %104 = vmatpush1.xpose.msra.mxu0 0.0
    %105 = vmatprep.subr.mxu0 0.0
    %106 = vmatpush1.xpose.msra.mxu0 0.0
    %107 = vmatprep.subr.mxu0 0.0
    %108 = vmatpush1.xpose.msra.mxu0 0.0
    %109 = vmatprep.subr.mxu0 0.0
    %110 = vmatpush1.xpose.msra.mxu0 0.0
    %111 = vmatprep.subr.mxu0 0.0
    %112 = vmatpush1.xpose.msra.mxu0 0.0
    %113 = vmatprep.subr.mxu0 0.0
    %114 = vmatpush1.xpose.msra.mxu0 0.0
    %115 = vmatprep.mubr.f32.mxu0 0.0
    %116 = vmatmul.mubr.f32.gmra.mrb[0].mxu0 %v50
    %v117 = vpop.f32.mrb[0].mxu0
    %v118 = vadd.f32 0.0, %v117
    %v119 = vpop.f32.mrb[0].mxu0
    %120 = vdwg.mxu0
    %s121 = smul.u32 0, 8
    %v122 = vlaneseq
    %v123 = vshrl.u32 %v122, 7
    %v124 = vstv %s121
    %v125 = vadd.s32 %v124, %v123
    %v126 = vlaneseq
    %v127 = vand.u32 %v126, 127
    %vm128 = vcmp.lt.s32.totalorder %v125, 4
    %vm129 = vcmp.ne.s32.totalorder %v127, %v125
    %vm130 = vcmp.lt.s32.totalorder %v127, 4
    %vm131 = vmand %vm129, %vm130
    %vm132 = vcmp.lt.s32.totalorder %v125, 2
    %v133 = vadd.s32 %v125, 2
    %v134 = vsub.s32 %v125, 2
    %v135 = vsel %vm132, %v133, %v134
    %vm136 = vcmp.eq.s32.totalorder %v127, %v135
    %v137 = vmul.f32 %v118, 1.442695
    %v138 = vpow.pop %v137
    %v139 = vsel %vm131, %v138, 0.0
    %vm140 = vcmask 64512
    %v141 = vsel %vm140, %v139, 0.0
    %142 = vadd.xlane.f32.xlu0 %v141
    %v143 = vpop.xlane.xlu0 %142
    %v144 = vsel %vm136, %v118, 0.0
    %v145 = vsel %vm140, %v144, 0.0
    %146 = vadd.xlane.f32.xlu0 %v145
    %v147 = vpop.xlane.xlu0 %146
    %v148 = vlog2.pop %v143
    %v149 = vmul.f32 %v148, 0.6931472
    %v150 = vsub.f32 %v149, %v147
    %v151 = vsel %vm128, %v150, 0.0
    %v152 = vrot.slane %v151, 4
    %v153 = vadd.f32 %v151, %v152
    %v154 = vrot.slane %v153, 2
    %v155 = vadd.f32 %v153, %v154
    %v156 = vrot.slane %v155, 1
    %v157 = vadd.f32 %v155, %v156
    %vm158 = vcmask 0
    %159 = vst.msk [vmem:[#allocation7] sm:$0x1] %vm158, %v157
    // Predicated region
    $region18: #{tpu_custom_call.1} parent=1 // pred_check
      _
    $region19: #{tpu_custom_call.1} parent=1 // pred_check_branch
      %161 = sbr.rel (0) target = $region21
    $region20: #{tpu_custom_call.1} parent=1 // pred_region
      %s163 = ssub.s32 16, 16
      %164 = vsyncadd [#allocation4], %s163
      %s166 = sshll.u32 [#allocation7], 4
      %s167 = int_to_ptr.vmem [resolvable:$true] %s166
      %169 = dma.vmem_to_hbm [thread:$0]  %s167, 16, %s2, [#allocation4]
    $region21: #{tpu_custom_call.1} parent=1 // pred_fallthru
      _
    // Predicated region
    $region22: #{tpu_custom_call.1} parent=1 // pred_check
      _
    $region23: #{tpu_custom_call.1} parent=1 // pred_check_branch
      %171 = sbr.rel (0) target = $region25
    $region24: #{tpu_custom_call.1} parent=1 // pred_region
      %172 = dma.done [#allocation4], 16
    $region25: #{tpu_custom_call.1} parent=1 // pred_fallthru
      _
    %173 = vsyncpa [#allocation3], 1
    %174 = vsyncpa [#allocation6], 1
    %175 = vsyncpa [#allocation4], 1

</llo_original>
